<compile_context>
chip_gen: v5e
topology: v5e:2x2
jax: 0.10.0
libtpu: 0.0.40
codegen_flags: <defaults>
</compile_context>

<pallas_src>
import jax
import jax.numpy as jnp
from jax.experimental import pallas as pl
from jax.experimental.pallas import tpu as pltpu

N, C = 8, 32           # rows (batch), classes — small deterministic problem size
SMOOTHING = 0.1


def label_smoothing_loss(x, target, smoothing=SMOOTHING):
    """x: (N, C) logits, target: (N, C) float (one-hot / soft labels). Returns scalar loss."""
    confidence = 1.0 - smoothing
    n, c = x.shape

    def kernel(x_ref, t_ref, out_ref):
        xf = x_ref[...].astype(jnp.float32)                  # (N, C)  (module does .float())
        tf = t_ref[...].astype(jnp.float32)                  # (N, C)

        # Single fused weight: folds confidence, the 1/C class-mean and the 1/N row-mean.
        #   loss = sum_{n,c} (-logprobs) * w
        w = (confidence * tf + (smoothing / c)) * (1.0 / n)  # (N, C), pure VPU, static scalars

        # Numerically-stable log-softmax pieces; logprobs itself is never materialized.
        m = jnp.max(xf, axis=-1, keepdims=True)              # (N, 1) XLU lane reduce
        z = xf - m                                            # (N, C)
        lse = jnp.log(jnp.sum(jnp.exp(z), axis=-1, keepdims=True))  # (N, 1) EUP + XLU

        # -logprobs = lse - z  =>  loss = sum_n lse_n * sum_c(w) - sum_{n,c} z * w
        w_row = jnp.sum(w, axis=-1, keepdims=True)            # (N, 1) lane reduce
        total = jnp.sum(lse * w_row) - jnp.sum(z * w)         # tree reduces to a scalar

        out_ref[0, 0] = total                                 # single scalar store, once

    out = pl.pallas_call(
        kernel,
        out_shape=jax.ShapeDtypeStruct((1, 1), jnp.float32),
        in_specs=[pl.BlockSpec(memory_space=pltpu.MemorySpace.VMEM),
                  pl.BlockSpec(memory_space=pltpu.MemorySpace.VMEM)],
        out_specs=pl.BlockSpec(memory_space=pltpu.MemorySpace.SMEM),
        cost_estimate=pl.CostEstimate(
            flops=6 * n * c,
            transcendentals=n * c + n,          # exp per element + log per row
            bytes_accessed=2 * n * c * 4 + 4,   # two f32 inputs + one f32 scalar out
        ),
    )(x, target)
    return out[0, 0]


def ref_loss(x, target, smoothing=SMOOTHING):
    """Pure-JAX reference of the PyTorch training-mode forward."""
    confidence = 1.0 - smoothing
    logprobs = jax.nn.log_softmax(x.astype(jnp.float32), axis=-1)
    nll = -(logprobs * target.astype(jnp.float32)).sum(-1)
    smooth = -logprobs.mean(-1)
    return (confidence * nll + smoothing * smooth).mean()


if __name__ == "__main__":
    key = jax.random.PRNGKey(0)
    kx, kt = jax.random.split(key)
    x = jax.random.normal(kx, (N, C), jnp.float32)
    labels = jax.random.randint(kt, (N,), 0, C)
    target = jax.nn.one_hot(labels, C, dtype=jnp.float32)   # one-hot float targets

    loss = jax.block_until_ready(label_smoothing_loss(x, target))
    ref = ref_loss(x, target)

    assert loss.shape == ()
    assert jnp.isfinite(loss)
    assert jnp.allclose(loss, ref, atol=1e-5, rtol=1e-5), (loss, ref)

    print("KERNEL_OK")
</pallas_src>

<mosaic_0001>
module attributes {stable_mosaic.version = 11 : i64} {
  func.func @kernel(%arg0: memref<8x32xf32, #tpu.memory_space<vmem>>, %arg1: memref<8x32xf32, #tpu.memory_space<vmem>>, %arg2: memref<1x1xf32, #tpu.memory_space<smem>>) attributes {dimension_semantics = [], scalar_prefetch = 0 : i64, scratch_operands = 0 : i64, tpu.core_type = #tpu.core_type<tc>} {
    %c0 = arith.constant 0 : index
    %c0_0 = arith.constant 0 : index
    %0 = vector.load %arg0[%c0, %c0_0] : memref<8x32xf32, #tpu.memory_space<vmem>>, vector<8x32xf32>
    %c0_1 = arith.constant 0 : index
    %c0_2 = arith.constant 0 : index
    %1 = vector.load %arg1[%c0_1, %c0_2] : memref<8x32xf32, #tpu.memory_space<vmem>>, vector<8x32xf32>
    %cst = arith.constant 0.899999976 : f32
    %2 = vector.broadcast %cst : f32 to vector<8x32xf32>
    %3 = arith.mulf %2, %1 : vector<8x32xf32>
    %cst_3 = arith.constant 3.125000e-03 : f32
    %4 = vector.broadcast %cst_3 : f32 to vector<8x32xf32>
    %5 = arith.addf %3, %4 : vector<8x32xf32>
    %cst_4 = arith.constant 1.250000e-01 : f32
    %6 = vector.broadcast %cst_4 : f32 to vector<8x32xf32>
    %7 = arith.mulf %5, %6 : vector<8x32xf32>
    %cst_5 = arith.constant dense<0xFF800000> : vector<8xf32>
    %8 = vector.multi_reduction <maximumf>, %0, %cst_5 [1] : vector<8x32xf32> to vector<8xf32>
    %9 = vector.shape_cast %8 : vector<8xf32> to vector<8x1xf32>
    %10 = vector.broadcast %9 : vector<8x1xf32> to vector<8x32xf32>
    %11 = arith.subf %0, %10 : vector<8x32xf32>
    %12 = math.exp %11 : vector<8x32xf32>
    %cst_6 = arith.constant dense<0.000000e+00> : vector<8xf32>
    %13 = vector.multi_reduction <add>, %12, %cst_6 [1] : vector<8x32xf32> to vector<8xf32>
    %14 = vector.shape_cast %13 : vector<8xf32> to vector<8x1xf32>
    %15 = math.log %14 : vector<8x1xf32>
    %cst_7 = arith.constant dense<0.000000e+00> : vector<8xf32>
    %16 = vector.multi_reduction <add>, %7, %cst_7 [1] : vector<8x32xf32> to vector<8xf32>
    %17 = vector.shape_cast %16 : vector<8xf32> to vector<8x1xf32>
    %18 = arith.mulf %15, %17 : vector<8x1xf32>
    %19 = vector.shape_cast %18 : vector<8x1xf32> to vector<1x8x1xf32>
    %cst_8 = arith.constant dense<0.000000e+00> : vector<1xf32>
    %20 = vector.multi_reduction <add>, %19, %cst_8 [1, 2] : vector<1x8x1xf32> to vector<1xf32>
    %21 = vector.shape_cast %20 : vector<1xf32> to vector<1x1x1xf32>
    %22 = vector.extract %21[0, 0, 0] : f32 from vector<1x1x1xf32>
    %23 = arith.mulf %11, %7 : vector<8x32xf32>
    %24 = vector.shape_cast %23 : vector<8x32xf32> to vector<1x8x32xf32>
    %cst_9 = arith.constant dense<0.000000e+00> : vector<1xf32>
    %25 = vector.multi_reduction <add>, %24, %cst_9 [1, 2] : vector<1x8x32xf32> to vector<1xf32>
    %26 = vector.shape_cast %25 : vector<1xf32> to vector<1x1x1xf32>
    %27 = vector.extract %26[0, 0, 0] : f32 from vector<1x1x1xf32>
    %28 = arith.subf %22, %27 : f32
    %c0_10 = arith.constant 0 : index
    %c0_11 = arith.constant 0 : index
    %29 = memref.load %arg2[%c0_10, %c0_11] : memref<1x1xf32, #tpu.memory_space<smem>>
    memref.store %28, %arg2[%c0_10, %c0_11] : memref<1x1xf32, #tpu.memory_space<smem>>
    return
  }
}

</mosaic_0001>

<llo_original>
// kernel: tpu_custom_call.1
$region0: #{tpu_custom_call.1}
  #allocation0 [shape = 'u32[]', space=smem, size = 0x4, offset = 0x4, fixed_abs, tag = 'smem constant byte address 0x4 - core index']
  #allocation1 [shape = 'u32[72,128]{1,0:T(1,128)}', space=vmem, size = 0x9000, scoped, tag = 'internal scratch']
  %s0 = inlined_call_operand.hbm [shape: f32[8,32], index: 0, kind: input, shape index: {}]
  %s1 = inlined_call_operand.hbm [shape: f32[8,32], index: 1, kind: input, shape index: {}]
  %s2 = inlined_call_operand.hbm [shape: f32[1,1], index: 2, kind: output, shape index: {}]
  %s3 = sld [smem:[#allocation0]]
  $region26: #{tpu_custom_call.1} parent=0
    _
  %s5 = ssub.s32 1, %s3
  %s6 = scalar_select 0, %s5, %s3
  $region1: #{tpu_custom_call.1} parent=0
    #allocation2 [shape = 'u8[4096]{0}', space=vmem, size = 0x1000, scoped, tag = 'input window, operand 0, single buffered']
    #allocation3 [shape = 's32[1]{0}', space=sflag, size = 0x4, scoped, tag = 'scoped memory for tpu_custom_call.1']
    #allocation4 [shape = 's32[1]{0}', space=sflag, size = 0x4, scoped, tag = 'scoped memory for tpu_custom_call.1']
    #allocation5 [shape = 'u8[4096]{0}', space=vmem, size = 0x1000, scoped, tag = 'input window, operand 1, single buffered']
    #allocation6 [shape = 's32[1]{0}', space=sflag, size = 0x4, scoped, tag = 'scoped memory for tpu_custom_call.1']
    #allocation7 [shape = 'u8[512]{0}', space=smem, size = 0x200, scoped, tag = 'output window, operand 0, single buffered']
    %7 = vsyncpa [#allocation3], 0
    %8 = vsyncpa [#allocation6], 0
    %9 = vsyncpa [#allocation4], 0
    // Predicated region
    $region2: #{tpu_custom_call.1} parent=1 // pred_check
      _
    $region3: #{tpu_custom_call.1} parent=1 // pred_check_branch
      %11 = sbr.rel (0) target = $region5
    $region4: #{tpu_custom_call.1} parent=1 // pred_region
      %13 = vsyncadd [#allocation3], 0
      %s15 = sshll.u32 %s0, 4
      %s16 = int_to_ptr.hbm [resolvable:$true] %s15
      %s17 = sshll.u32 [#allocation2], 4
      %s18 = int_to_ptr.vmem [resolvable:$true] %s17
      %20 = dma.hbm_to_vmem [thread:$0]  %s16, 128, %s18, [#allocation3]
    $region5: #{tpu_custom_call.1} parent=1 // pred_fallthru
      _
    // Predicated region
    $region6: #{tpu_custom_call.1} parent=1 // pred_check
      _
    $region7: #{tpu_custom_call.1} parent=1 // pred_check_branch
      %22 = sbr.rel (0) target = $region9
    $region8: #{tpu_custom_call.1} parent=1 // pred_region
      %24 = vsyncadd [#allocation6], 0
      %s26 = sshll.u32 %s1, 4
      %s27 = int_to_ptr.hbm [resolvable:$true] %s26
      %s28 = sshll.u32 [#allocation5], 4
      %s29 = int_to_ptr.vmem [resolvable:$true] %s28
      %31 = dma.hbm_to_vmem [thread:$0]  %s27, 128, %s29, [#allocation6]
    $region9: #{tpu_custom_call.1} parent=1 // pred_fallthru
      _
    // Predicated region
    $region10: #{tpu_custom_call.1} parent=1 // pred_check
      _
    $region11: #{tpu_custom_call.1} parent=1 // pred_check_branch
      %33 = sbr.rel (0) target = $region13
    $region12: #{tpu_custom_call.1} parent=1 // pred_region
      %35 = dma.done [#allocation3], 128
    $region13: #{tpu_custom_call.1} parent=1 // pred_fallthru
      _
    // Predicated region
    $region14: #{tpu_custom_call.1} parent=1 // pred_check
      _
    $region15: #{tpu_custom_call.1} parent=1 // pred_check_branch
      %37 = sbr.rel (0) target = $region17
    $region16: #{tpu_custom_call.1} parent=1 // pred_region
      %39 = dma.done [#allocation6], 128
    $region17: #{tpu_custom_call.1} parent=1 // pred_fallthru
      _
    %v40 = vld [vmem:[#allocation2] sm:$0xff]
    %v41 = vld [vmem:[#allocation5] sm:$0xff]
    %v42 = vmul.f32 %v41, 0.9
    %v43 = vadd.f32 %v42, 0.003125
    %v44 = vmul.f32 %v43, 0.125
    %vm45 = vcmask 261120
    %v46 = vsel %vm45, %v40, -inf
    %47 = vmax.xlane.f32.xlu0 %v46
    %v48 = vpop.xlane.xlu0 %47
    %v49 = vsub.f32 %v40, %v48
    %v50 = vmul.f32 %v49, 1.442695
    %v51 = vpow.pop %v50
    %v52 = vsel %vm45, %v51, 0.0
    %53 = vadd.xlane.f32.xlu0 %v52
    %v54 = vpop.xlane.xlu0 %53
    %v55 = vlog2.pop %v54
    %v56 = vmul.f32 %v55, 0.6931472
    %v57 = vsel %vm45, %v44, 0.0
    %58 = vadd.xlane.f32.xlu0 %v57
    %v59 = vpop.xlane.xlu0 %58
    %v60 = vmul.f32 %v56, %v59
    %vm61 = vcmask 7168
    %v62 = vsel %vm61, %v60, 0.0
    %63 = vadd.xlane.f32.xlu0 %v62
    %v64 = vpop.xlane.xlu0 %63
    %v65 = vrot.slane %v64, 4
    %v66 = vadd.f32 %v64, %v65
    %v67 = vrot.slane %v66, 2
    %v68 = vadd.f32 %v66, %v67
    %v69 = vrot.slane %v68, 1
    %v70 = vadd.f32 %v68, %v69
    %s71 = vtos %v70
    %v72 = vmul.f32 %v49, %v44
    %v73 = vsel %vm45, %v72, 0.0
    %74 = vadd.xlane.f32.xlu0 %v73
    %v75 = vpop.xlane.xlu0 %74
    %v76 = vrot.slane %v75, 4
    %v77 = vadd.f32 %v75, %v76
    %v78 = vrot.slane %v77, 2
    %v79 = vadd.f32 %v77, %v78
    %v80 = vrot.slane %v79, 1
    %v81 = vadd.f32 %v79, %v80
    %s82 = vtos %v81
    %s83 = ssub.f32 %s71, %s82
    %s84 = scalar_lea.smem [#allocation7], 0
    %85 = sst [smem:[%s84]] %s83
    // Predicated region
    $region18: #{tpu_custom_call.1} parent=1 // pred_check
      _
    $region19: #{tpu_custom_call.1} parent=1 // pred_check_branch
      %87 = sbr.rel (0) target = $region21
    $region20: #{tpu_custom_call.1} parent=1 // pred_region
      %89 = vsyncadd [#allocation4], 0
      %s91 = sshll.u32 %s2, 4
      %s92 = int_to_ptr.hbm [resolvable:$true] %s91
      %94 = dma.smem_to_hbm [#allocation7], 16, %s92, [#allocation4]
    $region21: #{tpu_custom_call.1} parent=1 // pred_fallthru
      _
    // Predicated region
    $region22: #{tpu_custom_call.1} parent=1 // pred_check
      _
    $region23: #{tpu_custom_call.1} parent=1 // pred_check_branch
      %96 = sbr.rel (0) target = $region25
    $region24: #{tpu_custom_call.1} parent=1 // pred_region
      %98 = dma.done [#allocation4], 16
    $region25: #{tpu_custom_call.1} parent=1 // pred_fallthru
      _
    %99 = sfence
    %100 = vsyncpa [#allocation3], 1
    %101 = vsyncpa [#allocation6], 1
    %102 = vsyncpa [#allocation4], 1

</llo_original>
